<compile_context>
chip_gen: v5e
topology: v5e:2x2
jax: 0.10.0
libtpu: 0.0.40
codegen_flags: <defaults>
</compile_context>

<pallas_src>
import functools

import jax
import jax.numpy as jnp
from jax.experimental import pallas as pl
from jax.experimental.pallas import tpu as pltpu

EPS = 1e-5                  # nn.BatchNorm2d default eps
LANE = 128                  # TPU lane width: channels are padded to a multiple of this
MM_DTYPE = jnp.bfloat16     # MXU operand dtype (accumulation stays f32)


def _round_up(x, m):
    return (x + m - 1) // m * m


# ---------------------------------------------------------------------------
# bn1 statistics: per-batch-element, per-channel sum / sum-of-squares partials
# ---------------------------------------------------------------------------
def _bn_stats_kernel(x_ref, sum_ref, sq_ref):
    x = x_ref[0].astype(jnp.float32)                    # (H, W, Cp)
    sum_ref[0] = jnp.sum(x, axis=(0, 1))[None, :]       # (1, Cp)
    sq_ref[0] = jnp.sum(x * x, axis=(0, 1))[None, :]    # (1, Cp)


def _bn1_stats(x):
    n, h, w, cp = x.shape
    sums, sqs = pl.pallas_call(
        _bn_stats_kernel,
        out_shape=(jax.ShapeDtypeStruct((n, 1, cp), jnp.float32),
                   jax.ShapeDtypeStruct((n, 1, cp), jnp.float32)),
        grid=(n,),
        in_specs=[pl.BlockSpec((1, h, w, cp), lambda i: (i, 0, 0, 0))],
        out_specs=(pl.BlockSpec((1, 1, cp), lambda i: (i, 0, 0)),
                   pl.BlockSpec((1, 1, cp), lambda i: (i, 0, 0))),
        compiler_params=pltpu.CompilerParams(
            dimension_semantics=("parallel",),
            vmem_limit_bytes=32 * 1024 * 1024),
    )(x)
    count = n * h * w
    mean = jnp.sum(sums, axis=0)[0] / count
    var = jnp.sum(sqs, axis=0)[0] / count - mean * mean  # biased (training-mode BN)
    return mean, var


# ---------------------------------------------------------------------------
# In-kernel helpers shared by both fused stages
# ---------------------------------------------------------------------------
def _bn_relu_into_padded(x_ref, scale_ref, bias_ref, pad_ref):
    """a = relu(x * scale + bias), written into the interior of the zeroed
    (H+2, W+2, C) VMEM scratch so the 3x3 conv needs no HBM padding pass."""
    x = x_ref[0].astype(jnp.float32)                    # (H, W, Cp)
    a = jnp.maximum(x * scale_ref[...] + bias_ref[...], 0.0)
    h, w = x.shape[0], x.shape[1]
    pad_ref[...] = jnp.zeros(pad_ref.shape, pad_ref.dtype)   # zero border (VMEM only)
    pad_ref[1:1 + h, 1:1 + w, :] = a
    return a


def _conv3x3_from_padded(pad_ref, w_ref, h_out, w_out, stride):
    """3x3 conv (zero-padding already inside `pad_ref`) as 9 shifted MXU matmuls.
    Stride is applied in-kernel via strided loads from the VMEM scratch."""
    cin = pad_ref.shape[-1]
    cout = w_ref.shape[-1]
    acc = jnp.zeros((h_out * w_out, cout), jnp.float32)
    for kh in range(3):
        for kw in range(3):
            if stride == 1:
                patch = pad_ref[kh:kh + h_out, kw:kw + w_out, :]
            else:
                patch = pad_ref[pl.ds(kh, h_out, stride=stride),
                                pl.ds(kw, w_out, stride=stride), :]
            lhs = patch.reshape(h_out * w_out, cin).astype(MM_DTYPE)
            acc = acc + jnp.dot(lhs, w_ref[kh, kw],
                                preferred_element_type=jnp.float32)
    return acc.reshape(h_out, w_out, cout)


# ---------------------------------------------------------------------------
# Stage 1: relu(bn1(x)) -> conv1 (3x3, stride) [+ projection shortcut]
#          with bn2 sum / sum-of-squares fused into the epilogue
# ---------------------------------------------------------------------------
def _stage1_proj_kernel(x_ref, s1_ref, b1_ref, w1_ref, wsc_ref,
                        c1_ref, sc_ref, sum_ref, sq_ref, pad_ref,
                        *, stride, h_out, w_out):
    a1 = _bn_relu_into_padded(x_ref, s1_ref, b1_ref, pad_ref)

    c1 = _conv3x3_from_padded(pad_ref, w1_ref, h_out, w_out, stride)
    c1_ref[0] = c1.astype(c1_ref.dtype)
    # bn2 statistics fused into conv1's epilogue (saves a full HBM re-read of c1)
    sum_ref[0] = jnp.sum(c1, axis=(0, 1))[None, :]
    sq_ref[0] = jnp.sum(c1 * c1, axis=(0, 1))[None, :]

    # 1x1 strided projection shortcut, reusing the same in-VMEM activation
    cin = a1.shape[-1]
    if stride == 1:
        a1s = a1
    else:
        a1s = pad_ref[pl.ds(1, h_out, stride=stride),
                      pl.ds(1, w_out, stride=stride), :]
    sc = jnp.dot(a1s.reshape(h_out * w_out, cin).astype(MM_DTYPE), wsc_ref[0, 0],
                 preferred_element_type=jnp.float32)
    sc_ref[0] = sc.reshape(h_out, w_out, sc.shape[-1]).astype(sc_ref.dtype)


def _stage1_identity_kernel(x_ref, s1_ref, b1_ref, w1_ref,
                            c1_ref, sc_ref, sum_ref, sq_ref, pad_ref,
                            *, h_out, w_out):
    a1 = _bn_relu_into_padded(x_ref, s1_ref, b1_ref, pad_ref)
    sc_ref[0] = a1.astype(sc_ref.dtype)                 # identity shortcut (stride 1)
    c1 = _conv3x3_from_padded(pad_ref, w1_ref, h_out, w_out, 1)
    c1_ref[0] = c1.astype(c1_ref.dtype)
    sum_ref[0] = jnp.sum(c1, axis=(0, 1))[None, :]
    sq_ref[0] = jnp.sum(c1 * c1, axis=(0, 1))[None, :]


# ---------------------------------------------------------------------------
# Stage 2: relu(bn2(c1)) -> conv2 (3x3, stride 1) + residual add
# ---------------------------------------------------------------------------
def _stage2_kernel(c1_ref, s2_ref, b2_ref, w2_ref, sc_ref,
                   o_ref, pad_ref, *, h_out, w_out):
    _bn_relu_into_padded(c1_ref, s2_ref, b2_ref, pad_ref)
    y = _conv3x3_from_padded(pad_ref, w2_ref, h_out, w_out, 1)
    o_ref[0] = (y + sc_ref[0].astype(jnp.float32)).astype(o_ref.dtype)


# ---------------------------------------------------------------------------
# PreActBlock forward (NCHW in / NCHW out; NHWC + lane-padded channels inside)
# ---------------------------------------------------------------------------
def preact_block_forward(x_nchw, params, stride):
    n, c_in, h, w = x_nchw.shape
    c_out = params["w_conv1"].shape[-1]
    cin_p = _round_up(c_in, LANE)
    cout_p = _round_up(c_out, LANE)
    h_out = (h - 1) // stride + 1        # conv3x3 pad=1 (== 1x1 conv pad=0) output size
    w_out = (w - 1) // stride + 1
    has_proj = "w_shortcut" in params

    # Boundary layout work only: NCHW -> NHWC, channel-pad to the lane width.
    x = jnp.transpose(x_nchw, (0, 2, 3, 1))
    x = jnp.pad(x, ((0, 0), (0, 0), (0, 0), (0, cin_p - c_in)))

    def pad_c(v, cp_):
        return jnp.pad(v.astype(jnp.float32), (0, cp_ - v.shape[0]))

    def pad_w(wt, ci_p, co_p):
        return jnp.pad(wt, ((0, 0), (0, 0),
                            (0, ci_p - wt.shape[2]),
                            (0, co_p - wt.shape[3]))).astype(MM_DTYPE)

    g1, b1 = pad_c(params["bn1_gamma"], cin_p), pad_c(params["bn1_beta"], cin_p)
    g2, b2 = pad_c(params["bn2_gamma"], cout_p), pad_c(params["bn2_beta"], cout_p)
    w1 = pad_w(params["w_conv1"], cin_p, cout_p)
    w2 = pad_w(params["w_conv2"], cout_p, cout_p)

    # ---- bn1 batch statistics (only extra pass over x) ----------------------
    mean1, var1 = _bn1_stats(x)
    inv1 = 1.0 / jnp.sqrt(var1 + EPS)
    scale1 = (g1 * inv1).reshape(1, cin_p).astype(jnp.float32)
    bias1 = (b1 - mean1 * g1 * inv1).reshape(1, cin_p).astype(jnp.float32)

    cparams = pltpu.CompilerParams(dimension_semantics=("parallel",),
                                   vmem_limit_bytes=32 * 1024 * 1024)

    # ---- stage 1: fused bn1+relu -> conv1 (+shortcut) + bn2 stats -----------
    in_specs = [
        pl.BlockSpec((1, h, w, cin_p), lambda i: (i, 0, 0, 0)),
        pl.BlockSpec((1, cin_p), lambda i: (0, 0)),
        pl.BlockSpec((1, cin_p), lambda i: (0, 0)),
        pl.BlockSpec((3, 3, cin_p, cout_p), lambda i: (0, 0, 0, 0)),
    ]
    args = [x, scale1, bias1, w1]
    if has_proj:
        wsc = pad_w(params["w_shortcut"], cin_p, cout_p)
        in_specs.append(pl.BlockSpec((1, 1, cin_p, cout_p), lambda i: (0, 0, 0, 0)))
        args.append(wsc)
        kern1 = functools.partial(_stage1_proj_kernel, stride=stride,
                                  h_out=h_out, w_out=w_out)
        sc_shape = (n, h_out, w_out, cout_p)
    else:
        kern1 = functools.partial(_stage1_identity_kernel, h_out=h_out, w_out=w_out)
        sc_shape = (n, h, w, cin_p)      # identity => stride == 1, cin_p == cout_p

    c1, shortcut, sum2, sq2 = pl.pallas_call(
        kern1,
        out_shape=(jax.ShapeDtypeStruct((n, h_out, w_out, cout_p), jnp.float32),
                   jax.ShapeDtypeStruct(sc_shape, jnp.float32),
                   jax.ShapeDtypeStruct((n, 1, cout_p), jnp.float32),
                   jax.ShapeDtypeStruct((n, 1, cout_p), jnp.float32)),
        grid=(n,),
        in_specs=in_specs,
        out_specs=(pl.BlockSpec((1, h_out, w_out, cout_p), lambda i: (i, 0, 0, 0)),
                   pl.BlockSpec((1,) + sc_shape[1:], lambda i: (i, 0, 0, 0)),
                   pl.BlockSpec((1, 1, cout_p), lambda i: (i, 0, 0)),
                   pl.BlockSpec((1, 1, cout_p), lambda i: (i, 0, 0))),
        scratch_shapes=[pltpu.VMEM((h + 2, w + 2, cin_p), jnp.float32)],
        compiler_params=cparams,
    )(*args)

    # ---- bn2 affine terms from the fused statistics -------------------------
    count2 = n * h_out * w_out
    mean2 = jnp.sum(sum2, axis=0)[0] / count2
    var2 = jnp.sum(sq2, axis=0)[0] / count2 - mean2 * mean2
    inv2 = 1.0 / jnp.sqrt(var2 + EPS)
    scale2 = (g2 * inv2).reshape(1, cout_p).astype(jnp.float32)
    bias2 = (b2 - mean2 * g2 * inv2).reshape(1, cout_p).astype(jnp.float32)

    # ---- stage 2: fused bn2+relu -> conv2 + residual add ---------------------
    out = pl.pallas_call(
        functools.partial(_stage2_kernel, h_out=h_out, w_out=w_out),
        out_shape=jax.ShapeDtypeStruct((n, h_out, w_out, cout_p), jnp.float32),
        grid=(n,),
        in_specs=[
            pl.BlockSpec((1, h_out, w_out, cout_p), lambda i: (i, 0, 0, 0)),
            pl.BlockSpec((1, cout_p), lambda i: (0, 0)),
            pl.BlockSpec((1, cout_p), lambda i: (0, 0)),
            pl.BlockSpec((3, 3, cout_p, cout_p), lambda i: (0, 0, 0, 0)),
            pl.BlockSpec((1, h_out, w_out, cout_p), lambda i: (i, 0, 0, 0)),
        ],
        out_specs=pl.BlockSpec((1, h_out, w_out, cout_p), lambda i: (i, 0, 0, 0)),
        scratch_shapes=[pltpu.VMEM((h_out + 2, w_out + 2, cout_p), jnp.float32)],
        compiler_params=cparams,
    )(c1, scale2, bias2, w2, shortcut)

    # Boundary layout work: drop channel padding, NHWC -> NCHW.
    out = out[..., :c_out]
    return jnp.transpose(out, (0, 3, 1, 2))


# ---------------------------------------------------------------------------
# Pure-JAX reference (mirrors the bf16 matmul operands for a tight comparison)
# ---------------------------------------------------------------------------
def _reference_forward(x_nchw, params, stride):
    def bn_relu_ref(x, g, b):
        mean = x.mean(axis=(0, 1, 2))
        var = x.var(axis=(0, 1, 2))
        return jnp.maximum((x - mean) / jnp.sqrt(var + EPS) * g + b, 0.0)

    def conv_ref(x, w, s, p):
        return jax.lax.conv_general_dilated(
            x.astype(MM_DTYPE), w.astype(MM_DTYPE), (s, s), [(p, p), (p, p)],
            dimension_numbers=("NHWC", "HWIO", "NHWC"),
            preferred_element_type=jnp.float32)

    x = jnp.transpose(x_nchw, (0, 2, 3, 1))
    a1 = bn_relu_ref(x, params["bn1_gamma"], params["bn1_beta"])
    sc = conv_ref(a1, params["w_shortcut"], stride, 0) if "w_shortcut" in params else a1
    c1 = conv_ref(a1, params["w_conv1"], stride, 1)
    a2 = bn_relu_ref(c1, params["bn2_gamma"], params["bn2_beta"])
    out = conv_ref(a2, params["w_conv2"], 1, 1) + sc
    return jnp.transpose(out, (0, 3, 1, 2))


def make_params(key, in_planes, planes, stride):
    ks = jax.random.split(key, 8)
    params = {
        "bn1_gamma": jax.random.uniform(ks[0], (in_planes,), jnp.float32, 0.5, 1.5),
        "bn1_beta": 0.1 * jax.random.normal(ks[1], (in_planes,), jnp.float32),
        "w_conv1": jax.random.normal(ks[2], (3, 3, in_planes, planes), jnp.float32)
                   * (2.0 / (9 * in_planes)) ** 0.5,
        "bn2_gamma": jax.random.uniform(ks[3], (planes,), jnp.float32, 0.5, 1.5),
        "bn2_beta": 0.1 * jax.random.normal(ks[4], (planes,), jnp.float32),
        "w_conv2": jax.random.normal(ks[5], (3, 3, planes, planes), jnp.float32)
                   * (2.0 / (9 * planes)) ** 0.5,
    }
    if stride != 1 or in_planes != planes:
        params["w_shortcut"] = (jax.random.normal(ks[6], (1, 1, in_planes, planes),
                                                  jnp.float32)
                                * (2.0 / in_planes) ** 0.5)
    return params


if __name__ == "__main__":
    N, IN_PLANES, PLANES, H, W, STRIDE = 2, 4, 8, 16, 16, 2

    key = jax.random.PRNGKey(0)
    kx, kp = jax.random.split(key)
    x = jax.random.normal(kx, (N, IN_PLANES, H, W), jnp.float32)   # NCHW like PyTorch
    params = make_params(kp, IN_PLANES, PLANES, STRIDE)

    out = jax.block_until_ready(preact_block_forward(x, params, STRIDE))
    ref = jax.block_until_ready(_reference_forward(x, params, STRIDE))

    assert out.shape == ref.shape, (out.shape, ref.shape)
    max_err = float(jnp.max(jnp.abs(out - ref)))
    assert jnp.allclose(out, ref, atol=1e-2, rtol=1e-2), max_err

    print("KERNEL_OK")
</pallas_src>

<mosaic_0001>
module attributes {stable_mosaic.version = 11 : i64} {
  func.func @_bn_stats_kernel(%arg0: i32, %arg1: memref<1x16x16x128xf32, #tpu.memory_space<vmem>>, %arg2: memref<1x1x128xf32, #tpu.memory_space<vmem>>, %arg3: memref<1x1x128xf32, #tpu.memory_space<vmem>>) attributes {dimension_semantics = [#tpu.dimension_semantics<parallel>], iteration_bounds = array<i64: 2>, scalar_prefetch = 0 : i64, scratch_operands = 0 : i64, tpu.core_type = #tpu.core_type<tc>, window_params = [{transform_indices = @transform_0, window_bounds = array<i64: 1, 16, 16, 128>}, {transform_indices = @transform_1, window_bounds = array<i64: 1, 1, 128>}, {transform_indices = @transform_2, window_bounds = array<i64: 1, 1, 128>}]} {
    %c0 = arith.constant 0 : index
    %c0_0 = arith.constant 0 : index
    %c0_1 = arith.constant 0 : index
    %c0_2 = arith.constant 0 : index
    %0 = vector.load %arg1[%c0, %c0_0, %c0_1, %c0_2] : memref<1x16x16x128xf32, #tpu.memory_space<vmem>>, vector<1x16x16x128xf32>
    %1 = vector.shape_cast %0 : vector<1x16x16x128xf32> to vector<16x16x128xf32>
    %cst = arith.constant dense<0.000000e+00> : vector<128xf32>
    %2 = vector.multi_reduction <add>, %1, %cst [0, 1] : vector<16x16x128xf32> to vector<128xf32>
    %3 = vector.shape_cast %2 : vector<128xf32> to vector<1x128xf32>
    %c0_3 = arith.constant 0 : index
    %c0_4 = arith.constant 0 : index
    %c0_5 = arith.constant 0 : index
    %4 = vector.load %arg2[%c0_3, %c0_4, %c0_5] : memref<1x1x128xf32, #tpu.memory_space<vmem>>, vector<1x1x128xf32>
    %5 = vector.shape_cast %4 : vector<1x1x128xf32> to vector<1x128xf32>
    %6 = vector.shape_cast %3 : vector<1x128xf32> to vector<1x1x128xf32>
    tpu.vector_store %arg2[%c0_3, %c0_4, %c0_5], %6 {strides = array<i32>} : memref<1x1x128xf32, #tpu.memory_space<vmem>>, vector<1x1x128xf32>,
    %7 = arith.mulf %1, %1 : vector<16x16x128xf32>
    %cst_6 = arith.constant dense<0.000000e+00> : vector<128xf32>
    %8 = vector.multi_reduction <add>, %7, %cst_6 [0, 1] : vector<16x16x128xf32> to vector<128xf32>
    %9 = vector.shape_cast %8 : vector<128xf32> to vector<1x128xf32>
    %c0_7 = arith.constant 0 : index
    %c0_8 = arith.constant 0 : index
    %c0_9 = arith.constant 0 : index
    %10 = vector.load %arg3[%c0_7, %c0_8, %c0_9] : memref<1x1x128xf32, #tpu.memory_space<vmem>>, vector<1x1x128xf32>
    %11 = vector.shape_cast %10 : vector<1x1x128xf32> to vector<1x128xf32>
    %12 = vector.shape_cast %9 : vector<1x128xf32> to vector<1x1x128xf32>
    tpu.vector_store %arg3[%c0_7, %c0_8, %c0_9], %12 {strides = array<i32>} : memref<1x1x128xf32, #tpu.memory_space<vmem>>, vector<1x1x128xf32>,
    return
  }
  func.func @transform_0(%arg0: i32) -> (i32, i32, i32, i32) {
    %c0_i32 = arith.constant 0 : i32
    %c0_i32_0 = arith.constant 0 : i32
    %c0_i32_1 = arith.constant 0 : i32
    %c0_i32_2 = arith.constant 0 : i32
    return %arg0, %c0_i32, %c0_i32_0, %c0_i32_1 : i32, i32, i32, i32
  }
  func.func @transform_1(%arg0: i32) -> (i32, i32, i32) {
    %c0_i32 = arith.constant 0 : i32
    %c0_i32_0 = arith.constant 0 : i32
    %c0_i32_1 = arith.constant 0 : i32
    return %arg0, %c0_i32, %c0_i32_0 : i32, i32, i32
  }
  func.func @transform_2(%arg0: i32) -> (i32, i32, i32) {
    %c0_i32 = arith.constant 0 : i32
    %c0_i32_0 = arith.constant 0 : i32
    %c0_i32_1 = arith.constant 0 : i32
    return %arg0, %c0_i32, %c0_i32_0 : i32, i32, i32
  }
}

</mosaic_0001>

<llo_original>
// kernel: tpu_custom_call.1
$region0: #{tpu_custom_call.1}
  #allocation0 [shape = 'u32[]', space=smem, size = 0x4, offset = 0x4, fixed_abs, tag = 'smem constant byte address 0x4 - core index']
  #allocation1 [shape = 'u32[72,128]{1,0:T(1,128)}', space=vmem, size = 0x9000, scoped, tag = 'internal scratch']
  %s0 = inlined_call_operand.hbm [shape: f32[2,16,16,128], index: 0, kind: input, shape index: {}]
  %s1 = inlined_call_operand.hbm [shape: f32[2,1,128], index: 1, kind: output, shape index: {0}]
  %s2 = inlined_call_operand.hbm [shape: f32[2,1,128], index: 2, kind: output, shape index: {1}]
  %3 = xla_tuple %s1, %s2
  %s4 = sld [smem:[#allocation0]]
  $region49: #{tpu_custom_call.1} parent=0
    _
  %s6 = ssub.s32 1, %s4
  %s7 = scalar_select 0, %s6, %s4
  $region1: #{tpu_custom_call.1} parent=0
    #allocation2 [shape = 'u8[262144]{0}', space=vmem, size = 0x40000, scoped, tag = 'input window, operand 0']
    #allocation3 [shape = 's32[2]{0}', space=sflag, size = 0x8, scoped, tag = 'scoped memory for tpu_custom_call.1']
    #allocation4 [shape = 's32[2]{0}', space=sflag, size = 0x8, scoped, tag = 'scoped memory for tpu_custom_call.1']
    #allocation5 [shape = 'u8[1024]{0}', space=vmem, size = 0x400, scoped, tag = 'output window, operand 0']
    #allocation6 [shape = 'u8[1024]{0}', space=vmem, size = 0x400, scoped, tag = 'output window, operand 1']
    #allocation7 [shape = 's32[2]{0}', space=sflag, size = 0x8, scoped, tag = 'scoped memory for tpu_custom_call.1']
    %8 = vsyncpa [#allocation3], 0
    %s9 = scalar_lea.sflag [#allocation3], 1
    %10 = vsyncpa %s9, 0
    %11 = vsyncpa [#allocation4], 0
    %s12 = scalar_lea.sflag [#allocation4], 1
    %13 = vsyncpa %s12, 0
    %14 = vsyncpa [#allocation7], 0
    %s15 = scalar_lea.sflag [#allocation7], 1
    %16 = vsyncpa %s15, 0
    loop: start=0, step=1, limit=4
    $region2: #{tpu_custom_call.1} parent=1 // loop_pre_header
      _
    $region3: #{tpu_custom_call.1} parent=1 // loop_header
      %s18 = sphi 0, %s22
      %p19 = scmp.ge.s32.totalorder %s18, 4
      %s28 = sphi 0, %s30
      %s31 = sphi 0, %s28
      %s32 = sphi 0, %s31
      %s48 = sphi 0, %s32
      %s54 = sphi 0, %s56
      %s57 = sphi 0, %s54
      %s58 = sphi 0, %s57
      %s74 = sphi 0, %s58
      %s80 = sphi 0, %s82
      %s83 = sphi 0, %s80
      %s84 = sphi 0, %s83
      %s100 = sphi 0, %s84
    $region4: #{tpu_custom_call.1} parent=1 // loop_header_branch
      %21 = sbr.rel (%p19) target = $region8
    $region5: #{tpu_custom_call.1} parent=1 // loop_body
      %s23 = ssub.s32 %s18, 1
      %s24 = ssub.s32 %s18, 2
      %s25 = sadd.s32 %s18, 1
      %s26 = ssub.s32 %s18, %s25
      %p27 = scmp.eq.s32.totalorder %s26, 0
      %s29 = sadd.s32 %s28, 1
      %s30 = scalar_select %p27, %s28, %s29
      %p33 = pneg %p27
      %p34 = scmp.eq.s32.totalorder %s18, 1
      %p35 = por %p33, %p34
      %p36 = scmp.ne.s32.totalorder %s28, %s31
      %p37 = scmp.eq.s32.totalorder %s18, 0
      %p38 = por %p36, %p37
      %p39 = scmp.ne.s32.totalorder %s28, %s31
      %p40 = scmp.eq.s32.totalorder %s23, 1
      %p41 = por %p39, %p40
      %p42 = scmp.ne.s32.totalorder %s31, %s32
      %p43 = scmp.eq.s32.totalorder %s23, 0
      %p44 = por %p42, %p43
      %p45 = scmp.ne.s32.totalorder %s31, %s32
      %p46 = scmp.eq.s32.totalorder %s24, 1
      %p47 = por %p45, %p46
      %p49 = scmp.ne.s32.totalorder %s32, %s48
      %p50 = scmp.eq.s32.totalorder %s24, 0
      %p51 = por %p49, %p50
      %s52 = ssub.s32 %s18, %s25
      %p53 = scmp.eq.s32.totalorder %s52, 0
      %s55 = sadd.s32 %s54, 1
      %s56 = scalar_select %p53, %s54, %s55
      %p59 = pneg %p53
      %p60 = scmp.eq.s32.totalorder %s18, 1
      %p61 = por %p59, %p60
      %p62 = scmp.ne.s32.totalorder %s54, %s57
      %p63 = scmp.eq.s32.totalorder %s18, 0
      %p64 = por %p62, %p63
      %p65 = scmp.ne.s32.totalorder %s54, %s57
      %p66 = scmp.eq.s32.totalorder %s23, 1
      %p67 = por %p65, %p66
      %p68 = scmp.ne.s32.totalorder %s57, %s58
      %p69 = scmp.eq.s32.totalorder %s23, 0
      %p70 = por %p68, %p69
      %p71 = scmp.ne.s32.totalorder %s57, %s58
      %p72 = scmp.eq.s32.totalorder %s24, 1
      %p73 = por %p71, %p72
      %p75 = scmp.ne.s32.totalorder %s58, %s74
      %p76 = scmp.eq.s32.totalorder %s24, 0
      %p77 = por %p75, %p76
      %s78 = ssub.s32 %s18, %s25
      %p79 = scmp.eq.s32.totalorder %s78, 0
      %s81 = sadd.s32 %s80, 1
      %s82 = scalar_select %p79, %s80, %s81
      %p85 = pneg %p79
      %p86 = scmp.eq.s32.totalorder %s18, 1
      %p87 = por %p85, %p86
      %p88 = scmp.ne.s32.totalorder %s80, %s83
      %p89 = scmp.eq.s32.totalorder %s18, 0
      %p90 = por %p88, %p89
      %p91 = scmp.ne.s32.totalorder %s80, %s83
      %p92 = scmp.eq.s32.totalorder %s23, 1
      %p93 = por %p91, %p92
      %p94 = scmp.ne.s32.totalorder %s83, %s84
      %p95 = scmp.eq.s32.totalorder %s23, 0
      %p96 = por %p94, %p95
      %p97 = scmp.ne.s32.totalorder %s83, %s84
      %p98 = scmp.eq.s32.totalorder %s24, 1
      %p99 = por %p97, %p98
      %p101 = scmp.ne.s32.totalorder %s84, %s100
      %p102 = scmp.eq.s32.totalorder %s24, 0
      %p103 = por %p101, %p102
      %p104 = scmp.le.s32.totalorder 1, %s18
      %p105 = scmp.lt.s32.totalorder %s18, 3
      %p106 = pnand %p104, %p105
      %p107 = pneg %p106
      // Predicated region
      $region9: #{tpu_custom_call.1} parent=5 // pred_check
        _
      $region10: #{tpu_custom_call.1} parent=5 // pred_check_branch
        %109 = sbr.rel (%p106) target = $region12
      $region11: #{tpu_custom_call.1} parent=5 // pred_region
        %s110 = ssub.s32 %s18, 1
      $region12: #{tpu_custom_call.1} parent=5 // pred_fallthru
        _
      %p111 = scmp.lt.s32.totalorder %s18, 2
      // Predicated region
      $region13: #{tpu_custom_call.1} parent=5 // pred_check
        %p112 = pneg %p111
      $region14: #{tpu_custom_call.1} parent=5 // pred_check_branch
        %114 = sbr.rel (%p112) target = $region16
      $region15: #{tpu_custom_call.1} parent=5 // pred_region
        // Predicated region
        $region17: #{tpu_custom_call.1} parent=15 // pred_check
          %p115 = pneg %p38
        $region18: #{tpu_custom_call.1} parent=15 // pred_check_branch
          %117 = sbr.rel (%p115) target = $region20
        $region19: #{tpu_custom_call.1} parent=15 // pred_region
          %s118 = sand.u32 %s28, 1
          %s119 = scalar_lea.sflag [#allocation3], %s118
          %s120 = sand.u32 %s28, 1
          %s121 = smul.addr %s120, 256
          %s122 = scalar_lea.vmem [#allocation2], %s121
          %124 = vsyncadd %s119, 0
          %s125 = smul.addr %s18, 32
          %s126 = smul.addr %s125, 8
          %s127 = scalar_lea.hbm %s0, %s126
          %s128 = sshll.u32 %s127, 4
          %s129 = int_to_ptr.hbm [resolvable:$true] %s128
          %s130 = sshll.u32 %s122, 4
          %s131 = int_to_ptr.vmem [resolvable:$true] %s130
          %136 = dma.hbm_to_vmem [thread:$0]  %s129, 4096, %s131, %s119, 128, 128, 8
        $region20: #{tpu_custom_call.1} parent=15 // pred_fallthru
          _
      $region16: #{tpu_custom_call.1} parent=5 // pred_fallthru
        _
      %p137 = scmp.le.s32.totalorder 1, %s18
      %p138 = scmp.lt.s32.totalorder %s18, 3
      %p139 = pnand %p137, %p138
      %p140 = pneg %p139
      // Predicated region
      $region21: #{tpu_custom_call.1} parent=5 // pred_check
        _
      $region22: #{tpu_custom_call.1} parent=5 // pred_check_branch
        %142 = sbr.rel (%p139) target = $region24
      $region23: #{tpu_custom_call.1} parent=5 // pred_region
        %s143 = ssub.s32 %s18, 1
        %s144 = sand.u32 %s31, 1
        %s145 = scalar_lea.sflag [#allocation3], %s144
        %s146 = sand.u32 %s31, 1
        %s147 = smul.addr %s146, 256
        %s148 = scalar_lea.vmem [#allocation2], %s147
        // Predicated region
        $region25: #{tpu_custom_call.1} parent=23 // pred_check
          %p149 = pneg %p44
        $region26: #{tpu_custom_call.1} parent=23 // pred_check_branch
          %151 = sbr.rel (%p149) target = $region28
        $region27: #{tpu_custom_call.1} parent=23 // pred_region
          %153 = dma.done %s145, 4096
        $region28: #{tpu_custom_call.1} parent=23 // pred_fallthru
          _
        %s154 = sand.u32 %s31, 1
        %s155 = scalar_lea.sflag [#allocation3], %s154
        %s156 = sand.u32 %s31, 1
        %s157 = smul.addr %s156, 256
        %s158 = scalar_lea.vmem [#allocation2], %s157
        %p159 = pneg %p44
        %p160 = pneg %p41
        %p161 = pneg %p70
        %p162 = pneg %p67
        %s163 = sand.u32 %s57, 1
        %s164 = scalar_lea.sflag [#allocation4], %s163
        %s165 = sand.u32 %s57, 1
        %s166 = scalar_lea.vmem [#allocation5], %s165
        %p167 = pneg %p96
        %p168 = pneg %p93
        %s169 = sand.u32 %s83, 1
        %s170 = scalar_lea.sflag [#allocation7], %s169
        %s171 = sand.u32 %s83, 1
        %s172 = scalar_lea.vmem [#allocation6], %s171
        %v173 = vld [vmem:[%s148] sm:$0xff]
        %v174 = vld [vmem:[%s148 + $0x8] sm:$0xff]
        %v175 = vld [vmem:[%s148 + $0x10] sm:$0xff]
        %v176 = vld [vmem:[%s148 + $0x18] sm:$0xff]
        %v177 = vld [vmem:[%s148 + $0x20] sm:$0xff]
        %v178 = vld [vmem:[%s148 + $0x28] sm:$0xff]
        %v179 = vld [vmem:[%s148 + $0x30] sm:$0xff]
        %v180 = vld [vmem:[%s148 + $0x38] sm:$0xff]
        %v181 = vld [vmem:[%s148 + $0x40] sm:$0xff]
        %v182 = vld [vmem:[%s148 + $0x48] sm:$0xff]
        %v183 = vld [vmem:[%s148 + $0x50] sm:$0xff]
        %v184 = vld [vmem:[%s148 + $0x58] sm:$0xff]
        %v185 = vld [vmem:[%s148 + $0x60] sm:$0xff]
        %v186 = vld [vmem:[%s148 + $0x68] sm:$0xff]
        %v187 = vld [vmem:[%s148 + $0x70] sm:$0xff]
        %v188 = vld [vmem:[%s148 + $0x78] sm:$0xff]
        %v189 = vld [vmem:[%s148 + $0x80] sm:$0xff]
        %v190 = vld [vmem:[%s148 + $0x88] sm:$0xff]
        %v191 = vld [vmem:[%s148 + $0x90] sm:$0xff]
        %v192 = vld [vmem:[%s148 + $0x98] sm:$0xff]
        %v193 = vld [vmem:[%s148 + $0xa0] sm:$0xff]
        %v194 = vld [vmem:[%s148 + $0xa8] sm:$0xff]
        %v195 = vld [vmem:[%s148 + $0xb0] sm:$0xff]
        %v196 = vld [vmem:[%s148 + $0xb8] sm:$0xff]
        %v197 = vld [vmem:[%s148 + $0xc0] sm:$0xff]
        %v198 = vld [vmem:[%s148 + $0xc8] sm:$0xff]
        %v199 = vld [vmem:[%s148 + $0xd0] sm:$0xff]
        %v200 = vld [vmem:[%s148 + $0xd8] sm:$0xff]
        %v201 = vld [vmem:[%s148 + $0xe0] sm:$0xff]
        %v202 = vld [vmem:[%s148 + $0xe8] sm:$0xff]
        %v203 = vld [vmem:[%s148 + $0xf0] sm:$0xff]
        %v204 = vld [vmem:[%s148 + $0xf8] sm:$0xff]
        %v205 = vadd.f32 %v173, %v174
        %v206 = vadd.f32 %v205, %v175
        %v207 = vadd.f32 %v206, %v176
        %v208 = vadd.f32 %v207, %v177
        %v209 = vadd.f32 %v208, %v178
        %v210 = vadd.f32 %v209, %v179
        %v211 = vadd.f32 %v210, %v180
        %v212 = vadd.f32 %v211, %v181
        %v213 = vadd.f32 %v212, %v182
        %v214 = vadd.f32 %v213, %v183
        %v215 = vadd.f32 %v214, %v184
        %v216 = vadd.f32 %v215, %v185
        %v217 = vadd.f32 %v216, %v186
        %v218 = vadd.f32 %v217, %v187
        %v219 = vadd.f32 %v218, %v188
        %v220 = vadd.f32 %v219, %v189
        %v221 = vadd.f32 %v220, %v190
        %v222 = vadd.f32 %v221, %v191
        %v223 = vadd.f32 %v222, %v192
        %v224 = vadd.f32 %v223, %v193
        %v225 = vadd.f32 %v224, %v194
        %v226 = vadd.f32 %v225, %v195
        %v227 = vadd.f32 %v226, %v196
        %v228 = vadd.f32 %v227, %v197
        %v229 = vadd.f32 %v228, %v198
        %v230 = vadd.f32 %v229, %v199
        %v231 = vadd.f32 %v230, %v200
        %v232 = vadd.f32 %v231, %v201
        %v233 = vadd.f32 %v232, %v202
        %v234 = vadd.f32 %v233, %v203
        %v235 = vadd.f32 %v234, %v204
        %v236 = vrot.slane %v235, 4
        %v237 = vadd.f32 %v235, %v236
        %v238 = vrot.slane %v237, 2
        %v239 = vadd.f32 %v237, %v238
        %v240 = vrot.slane %v239, 1
        %v241 = vadd.f32 %v239, %v240
        %242 = vst [vmem:[%s166] sm:$0x1] %v241
        %v243 = vmul.f32 %v173, %v173
        %v244 = vmul.f32 %v174, %v174
        %v245 = vmul.f32 %v175, %v175
        %v246 = vmul.f32 %v176, %v176
        %v247 = vmul.f32 %v177, %v177
        %v248 = vmul.f32 %v178, %v178
        %v249 = vmul.f32 %v179, %v179
        %v250 = vmul.f32 %v180, %v180
        %v251 = vmul.f32 %v181, %v181
        %v252 = vmul.f32 %v182, %v182
        %v253 = vmul.f32 %v183, %v183
        %v254 = vmul.f32 %v184, %v184
        %v255 = vmul.f32 %v185, %v185
        %v256 = vmul.f32 %v186, %v186
        %v257 = vmul.f32 %v187, %v187
        %v258 = vmul.f32 %v188, %v188
        %v259 = vmul.f32 %v189, %v189
        %v260 = vmul.f32 %v190, %v190
        %v261 = vmul.f32 %v191, %v191
        %v262 = vmul.f32 %v192, %v192
        %v263 = vmul.f32 %v193, %v193
        %v264 = vmul.f32 %v194, %v194
        %v265 = vmul.f32 %v195, %v195
        %v266 = vmul.f32 %v196, %v196
        %v267 = vmul.f32 %v197, %v197
        %v268 = vmul.f32 %v198, %v198
        %v269 = vmul.f32 %v199, %v199
        %v270 = vmul.f32 %v200, %v200
        %v271 = vmul.f32 %v201, %v201
        %v272 = vmul.f32 %v202, %v202
        %v273 = vmul.f32 %v203, %v203
        %v274 = vmul.f32 %v204, %v204
        %v275 = vadd.f32 %v243, %v244
        %v276 = vadd.f32 %v275, %v245
        %v277 = vadd.f32 %v276, %v246
        %v278 = vadd.f32 %v277, %v247
        %v279 = vadd.f32 %v278, %v248
        %v280 = vadd.f32 %v279, %v249
        %v281 = vadd.f32 %v280, %v250
        %v282 = vadd.f32 %v281, %v251
        %v283 = vadd.f32 %v282, %v252
        %v284 = vadd.f32 %v283, %v253
        %v285 = vadd.f32 %v284, %v254
        %v286 = vadd.f32 %v285, %v255
        %v287 = vadd.f32 %v286, %v256
        %v288 = vadd.f32 %v287, %v257
        %v289 = vadd.f32 %v288, %v258
        %v290 = vadd.f32 %v289, %v259
        %v291 = vadd.f32 %v290, %v260
        %v292 = vadd.f32 %v291, %v261
        %v293 = vadd.f32 %v292, %v262
        %v294 = vadd.f32 %v293, %v263
        %v295 = vadd.f32 %v294, %v264
        %v296 = vadd.f32 %v295, %v265
        %v297 = vadd.f32 %v296, %v266
        %v298 = vadd.f32 %v297, %v267
        %v299 = vadd.f32 %v298, %v268
        %v300 = vadd.f32 %v299, %v269
        %v301 = vadd.f32 %v300, %v270
        %v302 = vadd.f32 %v301, %v271
        %v303 = vadd.f32 %v302, %v272
        %v304 = vadd.f32 %v303, %v273
        %v305 = vadd.f32 %v304, %v274
        %v306 = vrot.slane %v305, 4
        %v307 = vadd.f32 %v305, %v306
        %v308 = vrot.slane %v307, 2
        %v309 = vadd.f32 %v307, %v308
        %v310 = vrot.slane %v309, 1
        %v311 = vadd.f32 %v309, %v310
        %312 = vst [vmem:[%s172] sm:$0x1] %v311
        %s313 = sand.u32 %s57, 1
        %s314 = scalar_lea.sflag [#allocation4], %s313
        %s315 = sand.u32 %s57, 1
        %s316 = scalar_lea.vmem [#allocation5], %s315
        %s317 = sand.u32 %s83, 1
        %s318 = scalar_lea.sflag [#allocation7], %s317
        %s319 = sand.u32 %s83, 1
        %s320 = scalar_lea.vmem [#allocation6], %s319
        // Predicated region
        $region29: #{tpu_custom_call.1} parent=23 // pred_check
          %p321 = pneg %p67
        $region30: #{tpu_custom_call.1} parent=23 // pred_check_branch
          %323 = sbr.rel (%p321) target = $region32
        $region31: #{tpu_custom_call.1} parent=23 // pred_region
          %325 = vsyncadd %s314, 0
          %s326 = scalar_lea.hbm %s1, %s23
          %s328 = sshll.u32 %s316, 4
          %s329 = int_to_ptr.vmem [resolvable:$true] %s328
          %s330 = sshll.u32 %s326, 4
          %s331 = int_to_ptr.hbm [resolvable:$true] %s330
          %333 = dma.vmem_to_hbm [thread:$0]  %s329, 16, %s331, %s314
        $region32: #{tpu_custom_call.1} parent=23 // pred_fallthru
          _
        // Predicated region
        $region33: #{tpu_custom_call.1} parent=23 // pred_check
          %p334 = pneg %p93
        $region34: #{tpu_custom_call.1} parent=23 // pred_check_branch
          %336 = sbr.rel (%p334) target = $region36
        $region35: #{tpu_custom_call.1} parent=23 // pred_region
          %338 = vsyncadd %s318, 0
          %s339 = scalar_lea.hbm %s2, %s23
          %s341 = sshll.u32 %s320, 4
          %s342 = int_to_ptr.vmem [resolvable:$true] %s341
          %s343 = sshll.u32 %s339, 4
          %s344 = int_to_ptr.hbm [resolvable:$true] %s343
          %346 = dma.vmem_to_hbm [thread:$0]  %s342, 16, %s344, %s318
        $region36: #{tpu_custom_call.1} parent=23 // pred_fallthru
          _
      $region24: #{tpu_custom_call.1} parent=5 // pred_fallthru
        _
      %p347 = scmp.le.s32.totalorder 2, %s18
      // Predicated region
      $region37: #{tpu_custom_call.1} parent=5 // pred_check
        %p348 = pneg %p347
      $region38: #{tpu_custom_call.1} parent=5 // pred_check_branch
        %350 = sbr.rel (%p348) target = $region40
      $region39: #{tpu_custom_call.1} parent=5 // pred_region
        %s351 = ssub.s32 %s18, 2
        // Predicated region
        $region41: #{tpu_custom_call.1} parent=39 // pred_check
          %p352 = pneg %p73
        $region42: #{tpu_custom_call.1} parent=39 // pred_check_branch
          %354 = sbr.rel (%p352) target = $region44
        $region43: #{tpu_custom_call.1} parent=39 // pred_region
          %s355 = sand.u32 %s58, 1
          %s356 = scalar_lea.sflag [#allocation4], %s355
          %s357 = sand.u32 %s58, 1
          %s358 = scalar_lea.vmem [#allocation5], %s357
          %360 = dma.done %s356, 16
        $region44: #{tpu_custom_call.1} parent=39 // pred_fallthru
          _
        // Predicated region
        $region45: #{tpu_custom_call.1} parent=39 // pred_check
          %p361 = pneg %p99
        $region46: #{tpu_custom_call.1} parent=39 // pred_check_branch
          %363 = sbr.rel (%p361) target = $region48
        $region47: #{tpu_custom_call.1} parent=39 // pred_region
          %s364 = sand.u32 %s84, 1
          %s365 = scalar_lea.sflag [#allocation7], %s364
          %s366 = sand.u32 %s84, 1
          %s367 = scalar_lea.vmem [#allocation6], %s366
          %369 = dma.done %s365, 16
        $region48: #{tpu_custom_call.1} parent=39 // pred_fallthru
          _
      $region40: #{tpu_custom_call.1} parent=5 // pred_fallthru
        _
    $region6: #{tpu_custom_call.1} parent=1 // loop_footer
      %s22 = sadd.s32 1, %s18
    $region7: #{tpu_custom_call.1} parent=1 // loop_footer_branch
      %17 = sbr.rel target = $region3
    $region8: #{tpu_custom_call.1} parent=1 // loop_exit
      _
    %370 = vsyncpa [#allocation3], 1
    %s371 = scalar_lea.sflag [#allocation3], 1
    %372 = vsyncpa %s371, 1
    %373 = vsyncpa [#allocation4], 1
    %s374 = scalar_lea.sflag [#allocation4], 1
    %375 = vsyncpa %s374, 1
    %376 = vsyncpa [#allocation7], 1
    %s377 = scalar_lea.sflag [#allocation7], 1
    %378 = vsyncpa %s377, 1

</llo_original>
